<compile_context>
chip_gen: v6e
topology: v6e:2x2x1
jax: 0.10.0
libtpu: 0.0.40
codegen_flags: <defaults>
</compile_context>

<pallas_src>
import math

import jax
import jax.numpy as jnp
from jax.experimental import pallas as pl
from jax.experimental.pallas import tpu as pltpu

EPS = 1e-5
_INV_SQRT2 = 1.0 / math.sqrt(2.0)


def _head_block_kernel(x_ref, w1_ref, aff1_ref, w2_ref, aff2_ref, o_ref):
    nb = x_ref.shape[0]
    x = x_ref[...].astype(jnp.float32)                 # (Nb, Cin, L)
    w1 = w1_ref[...]                                   # (Cmid, Cin)
    w2 = w2_ref[...]                                   # (Cout, Cmid)
    cmid, cin = w1.shape
    cout = w2.shape[0]

    # Packed per-channel params: columns [bias, gamma, beta].
    b1, g1, be1 = aff1_ref[:, 0:1], aff1_ref[:, 1:2], aff1_ref[:, 2:3]   # (Cmid, 1)
    b2, g2, be2 = aff2_ref[:, 0:1], aff2_ref[:, 1:2], aff2_ref[:, 2:3]   # (Cout, 1)

    # --- Conv2d(in, mid, kernel_size=1): batched (Cmid,Cin)@(Cin,L) ---
    w1b = jnp.broadcast_to(w1, (nb, cmid, cin))
    h = jnp.einsum("bmc,bcl->bml", w1b, x, preferred_element_type=jnp.float32)
    h = h + b1[None]                                   # (Nb, Cmid, L)

    # --- GroupNorm(1, mid): per-sample stats (axes (1,2)), single-pass.
    # Var via E[x^2]-E[x]^2, clamped at 0 (can drift vs two-pass if |mean|>>std).
    n1 = jnp.float32(cmid * h.shape[2])
    s1 = jnp.sum(h, axis=(1, 2), keepdims=True)        # (Nb,1,1)
    s2 = jnp.sum(h * h, axis=(1, 2), keepdims=True)
    mu = s1 / n1
    var = jnp.maximum(s2 / n1 - mu * mu, 0.0)
    inv = jax.lax.rsqrt(var + EPS)                     # EUP slot
    scale = inv * g1[None]                             # (Nb, Cmid, 1)
    shift = be1[None] - mu * scale
    h = h * scale + shift                              # fused normalize + affine

    # --- GELU (exact, erf-based: PyTorch nn.GELU() default) ---
    h = 0.5 * h * (1.0 + jax.lax.erf(h * jnp.float32(_INV_SQRT2)))

    # --- Conv2d(mid, out, kernel_size=1) ---
    w2b = jnp.broadcast_to(w2, (nb, cout, cmid))
    y = jnp.einsum("bom,bml->bol", w2b, h, preferred_element_type=jnp.float32)
    y = y + b2[None]                                   # (Nb, Cout, L)

    # --- GroupNorm(1, out), per-sample, fused ---
    n2 = jnp.float32(cout * y.shape[2])
    t1 = jnp.sum(y, axis=(1, 2), keepdims=True)
    t2 = jnp.sum(y * y, axis=(1, 2), keepdims=True)
    mu2 = t1 / n2
    var2 = jnp.maximum(t2 / n2 - mu2 * mu2, 0.0)
    inv2 = jax.lax.rsqrt(var2 + EPS)
    scale2 = inv2 * g2[None]
    shift2 = be2[None] - mu2 * scale2
    y = y * scale2 + shift2

    o_ref[...] = y.astype(o_ref.dtype)


def _vmem_capacity_bytes():
    try:
        info = pltpu.get_tpu_info()
        cap = getattr(info, "vmem_capacity_bytes", None)
        if cap:
            return int(cap)
    except Exception:
        pass
    return 128 * 1024 * 1024   # v5e/v6e default


def _pick_nb(N, Cin, Cmid, Cout, L, budget_bytes):
    """Samples per grid step, sized against a VMEM budget (f32 activations):
    double-buffered in/out blocks + h/y intermediates + elementwise temps."""
    per_sample = 4 * L * (2 * Cin + 2 * Cout + 3 * Cmid + Cout)
    nb = max(1, min(N, int(budget_bytes // max(per_sample, 1)), 32))
    if N >= 2:
        # Keep >= 2 grid steps so both v7x TensorCores get work (no-op v5e/v6e).
        nb = min(nb, (N + 1) // 2)
    return int(max(nb, 1))


@jax.jit
def head_block_pallas(x_nchw, params):
    """x_nchw: (N, Cin, H, W) float32. Returns (N, Cout, H, W)."""
    w1, aff1, w2, aff2 = params
    N, Cin, H, W = x_nchw.shape
    Cmid = w1.shape[0]
    Cout = w2.shape[0]
    L = H * W

    # NCHW -> (N, Cin, L): free reshape (no HBM transpose).
    x = x_nchw.reshape(N, Cin, L)

    # Generation-aware scoped-VMEM limit: ~80% of physical capacity
    # (~51 MiB on v7x 64 MiB parts, ~102 MiB on v5e/v6e 128 MiB parts).
    vmem_cap = _vmem_capacity_bytes()
    vmem_limit = int(min(max(int(vmem_cap * 0.8), 16 * 1024 * 1024), vmem_cap))

    nb = _pick_nb(N, Cin, Cmid, Cout, L, vmem_limit // 2)
    steps = -(-N // nb)
    n_pad = steps * nb
    if n_pad != N:
        # Zero-pad the batch; GroupNorm is per-sample so padded rows are inert
        # (no NaNs: var clamped, eps added) and are sliced off below.
        x = jnp.pad(x, ((0, n_pad - N), (0, 0), (0, 0)))

    out = pl.pallas_call(
        _head_block_kernel,
        out_shape=jax.ShapeDtypeStruct((n_pad, Cout, L), x.dtype),
        grid_spec=pltpu.PrefetchScalarGridSpec(
            num_scalar_prefetch=0,
            grid=(steps,),
            in_specs=[
                pl.BlockSpec((nb, Cin, L), lambda n: (n, 0, 0)),
                # Params: constant index_maps -> stay resident across the grid.
                pl.BlockSpec((Cmid, Cin), lambda n: (0, 0)),
                pl.BlockSpec((Cmid, 3), lambda n: (0, 0)),
                pl.BlockSpec((Cout, Cmid), lambda n: (0, 0)),
                pl.BlockSpec((Cout, 3), lambda n: (0, 0)),
            ],
            out_specs=pl.BlockSpec((nb, Cout, L), lambda n: (n, 0, 0)),
        ),
        compiler_params=pltpu.CompilerParams(
            dimension_semantics=("parallel",),
            vmem_limit_bytes=vmem_limit),
    )(x, w1, aff1, w2, aff2)

    if n_pad != N:
        out = out[:N]
    # (N, Cout, L) -> NCHW: free reshape.
    return out.reshape(N, Cout, H, W)


def head_block_ref(x_nchw, params):
    """Pure-JAX reference matching the PyTorch module semantics."""
    w1, aff1, w2, aff2 = params
    b1, g1, be1 = aff1[:, 0:1], aff1[:, 1:2], aff1[:, 2:3]
    b2, g2, be2 = aff2[:, 0:1], aff2[:, 1:2], aff2[:, 2:3]
    N, Cin, H, W = x_nchw.shape
    x = x_nchw.reshape(N, Cin, H * W)

    def gn1(h, gamma, beta):  # GroupNorm(num_groups=1) over (C, L) per sample
        mu = jnp.mean(h, axis=(1, 2), keepdims=True)
        var = jnp.mean((h - mu) ** 2, axis=(1, 2), keepdims=True)
        return (h - mu) / jnp.sqrt(var + EPS) * gamma + beta

    h = jnp.einsum("mc,ncl->nml", w1, x) + b1
    h = gn1(h, g1, be1)
    h = 0.5 * h * (1.0 + jax.lax.erf(h / jnp.sqrt(2.0)))
    y = jnp.einsum("om,nml->nol", w2, h) + b2
    y = gn1(y, g2, be2)
    Cout = w2.shape[0]
    return y.reshape(N, Cout, H, W)


def make_params(key, in_channels, mid_channels, out_channels):
    """Deterministic init. Conv weights in natural (out, in) layout; per-channel
    [bias, gamma, beta] packed as one (C, 3) block per layer."""
    k1, k2, k3, k4 = jax.random.split(key, 4)
    lim1 = 1.0 / math.sqrt(in_channels)
    w1 = jax.random.uniform(k1, (mid_channels, in_channels), jnp.float32, -lim1, lim1)
    b1 = jax.random.uniform(k2, (mid_channels, 1), jnp.float32, -lim1, lim1)
    g1 = jnp.ones((mid_channels, 1), jnp.float32)
    be1 = jnp.zeros((mid_channels, 1), jnp.float32)
    aff1 = jnp.concatenate([b1, g1, be1], axis=1)          # (Cmid, 3)
    lim2 = 1.0 / math.sqrt(mid_channels)
    w2 = jax.random.uniform(k3, (out_channels, mid_channels), jnp.float32, -lim2, lim2)
    b2 = jax.random.uniform(k4, (out_channels, 1), jnp.float32, -lim2, lim2)
    g2 = jnp.ones((out_channels, 1), jnp.float32)
    be2 = jnp.zeros((out_channels, 1), jnp.float32)
    aff2 = jnp.concatenate([b2, g2, be2], axis=1)          # (Cout, 3)
    return (w1, aff1, w2, aff2)


if __name__ == "__main__":
    key = jax.random.PRNGKey(0)
    kx, kp = jax.random.split(key)

    N, Cin, H, W = 2, 4, 16, 16
    Cmid, Cout = 32, 32

    x = jax.random.normal(kx, (N, Cin, H, W), dtype=jnp.float32)
    params = make_params(kp, Cin, Cmid, Cout)

    out = jax.block_until_ready(head_block_pallas(x, params))

    ref = head_block_ref(x, params)
    assert out.shape == (N, Cout, H, W)
    assert jnp.allclose(out, ref, atol=1e-4, rtol=1e-4), "mismatch vs reference"

    print("KERNEL_OK")
</pallas_src>

<mosaic_0001>
module attributes {stable_mosaic.version = 11 : i64} {
  func.func @_head_block_kernel(%arg0: i32, %arg1: memref<1x4x256xf32, #tpu.memory_space<vmem>>, %arg2: memref<32x4xf32, #tpu.memory_space<vmem>>, %arg3: memref<32x3xf32, #tpu.memory_space<vmem>>, %arg4: memref<32x32xf32, #tpu.memory_space<vmem>>, %arg5: memref<32x3xf32, #tpu.memory_space<vmem>>, %arg6: memref<1x32x256xf32, #tpu.memory_space<vmem>>) attributes {dimension_semantics = [#tpu.dimension_semantics<parallel>], iteration_bounds = array<i64: 2>, scalar_prefetch = 0 : i64, scratch_operands = 0 : i64, tpu.core_type = #tpu.core_type<tc>, window_params = [{transform_indices = @transform_0, window_bounds = array<i64: 1, 4, 256>}, {pipeline_mode = #tpu.pipeline_mode<synchronous>, transform_indices = @transform_1, window_bounds = array<i64: 32, 4>}, {pipeline_mode = #tpu.pipeline_mode<synchronous>, transform_indices = @transform_2, window_bounds = array<i64: 32, 3>}, {pipeline_mode = #tpu.pipeline_mode<synchronous>, transform_indices = @transform_3, window_bounds = array<i64: 32, 32>}, {pipeline_mode = #tpu.pipeline_mode<synchronous>, transform_indices = @transform_4, window_bounds = array<i64: 32, 3>}, {transform_indices = @transform_5, window_bounds = array<i64: 1, 32, 256>}]} {
    %c0 = arith.constant 0 : index
    %c0_0 = arith.constant 0 : index
    %c0_1 = arith.constant 0 : index
    %0 = vector.load %arg1[%c0, %c0_0, %c0_1] : memref<1x4x256xf32, #tpu.memory_space<vmem>>, vector<1x4x256xf32>
    %c0_2 = arith.constant 0 : index
    %c0_3 = arith.constant 0 : index
    %1 = vector.load %arg2[%c0_2, %c0_3] : memref<32x4xf32, #tpu.memory_space<vmem>>, vector<32x4xf32>
    %c0_4 = arith.constant 0 : index
    %c0_5 = arith.constant 0 : index
    %2 = vector.load %arg4[%c0_4, %c0_5] : memref<32x32xf32, #tpu.memory_space<vmem>>, vector<32x32xf32>
    %c0_6 = arith.constant 0 : index
    %c0_7 = arith.constant 0 : index
    %3 = vector.load %arg3[%c0_6, %c0_7] : memref<32x3xf32, #tpu.memory_space<vmem>>, vector<32x1xf32>
    %c0_8 = arith.constant 0 : index
    %c1 = arith.constant 1 : index
    %4 = vector.load %arg3[%c0_8, %c1] : memref<32x3xf32, #tpu.memory_space<vmem>>, vector<32x1xf32>
    %c0_9 = arith.constant 0 : index
    %c2 = arith.constant 2 : index
    %5 = vector.load %arg3[%c0_9, %c2] : memref<32x3xf32, #tpu.memory_space<vmem>>, vector<32x1xf32>
    %c0_10 = arith.constant 0 : index
    %c0_11 = arith.constant 0 : index
    %6 = vector.load %arg5[%c0_10, %c0_11] : memref<32x3xf32, #tpu.memory_space<vmem>>, vector<32x1xf32>
    %c0_12 = arith.constant 0 : index
    %c1_13 = arith.constant 1 : index
    %7 = vector.load %arg5[%c0_12, %c1_13] : memref<32x3xf32, #tpu.memory_space<vmem>>, vector<32x1xf32>
    %c0_14 = arith.constant 0 : index
    %c2_15 = arith.constant 2 : index
    %8 = vector.load %arg5[%c0_14, %c2_15] : memref<32x3xf32, #tpu.memory_space<vmem>>, vector<32x1xf32>
    %9 = vector.shape_cast %1 : vector<32x4xf32> to vector<1x32x4xf32>
    "tpu.trace_start"() <{level = 10 : i32, message = "bmc,bcl->bml"}> : () -> ()
    %cst = arith.constant dense<0.000000e+00> : vector<1x32x256xf32>
    %10 = tpu.matmul %9, %0, %cst {dimension_numbers = #tpu.dot_dimension_numbers<[2], [1], [1], [2], [0, 0, 0, 1, 1, 2], [0], [0]>} : vector<1x32x4xf32>, vector<1x4x256xf32>, vector<1x32x256xf32> -> vector<1x32x256xf32>
    "tpu.trace_stop"() : () -> ()
    %11 = vector.shape_cast %3 : vector<32x1xf32> to vector<1x32x1xf32>
    %12 = vector.broadcast %11 : vector<1x32x1xf32> to vector<1x32x256xf32>
    %13 = arith.addf %10, %12 : vector<1x32x256xf32>
    %cst_16 = arith.constant dense<0.000000e+00> : vector<1xf32>
    %14 = vector.multi_reduction <add>, %13, %cst_16 [1, 2] : vector<1x32x256xf32> to vector<1xf32>
    %15 = vector.shape_cast %14 : vector<1xf32> to vector<1x1x1xf32>
    %16 = arith.mulf %13, %13 : vector<1x32x256xf32>
    %cst_17 = arith.constant dense<0.000000e+00> : vector<1xf32>
    %17 = vector.multi_reduction <add>, %16, %cst_17 [1, 2] : vector<1x32x256xf32> to vector<1xf32>
    %18 = vector.shape_cast %17 : vector<1xf32> to vector<1x1x1xf32>
    %cst_18 = arith.constant 8.192000e+03 : f32
    %19 = vector.broadcast %cst_18 : f32 to vector<1x1x1xf32>
    %20 = arith.divf %15, %19 : vector<1x1x1xf32>
    %cst_19 = arith.constant 8.192000e+03 : f32
    %21 = vector.broadcast %cst_19 : f32 to vector<1x1x1xf32>
    %22 = arith.divf %18, %21 : vector<1x1x1xf32>
    %23 = arith.mulf %20, %20 : vector<1x1x1xf32>
    %24 = arith.subf %22, %23 : vector<1x1x1xf32>
    %cst_20 = arith.constant 0.000000e+00 : f32
    %25 = vector.broadcast %cst_20 : f32 to vector<1x1x1xf32>
    %26 = arith.maximumf %24, %25 : vector<1x1x1xf32>
    %cst_21 = arith.constant 9.99999974E-6 : f32
    %27 = vector.broadcast %cst_21 : f32 to vector<1x1x1xf32>
    %28 = arith.addf %26, %27 : vector<1x1x1xf32>
    %29 = math.rsqrt %28 : vector<1x1x1xf32>
    %30 = vector.shape_cast %4 : vector<32x1xf32> to vector<1x32x1xf32>
    %31 = vector.broadcast %29 : vector<1x1x1xf32> to vector<1x32x1xf32>
    %32 = arith.mulf %31, %30 : vector<1x32x1xf32>
    %33 = vector.shape_cast %5 : vector<32x1xf32> to vector<1x32x1xf32>
    %34 = vector.broadcast %20 : vector<1x1x1xf32> to vector<1x32x1xf32>
    %35 = arith.mulf %34, %32 : vector<1x32x1xf32>
    %36 = arith.subf %33, %35 : vector<1x32x1xf32>
    %37 = vector.broadcast %32 : vector<1x32x1xf32> to vector<1x32x256xf32>
    %38 = arith.mulf %13, %37 : vector<1x32x256xf32>
    %39 = vector.broadcast %36 : vector<1x32x1xf32> to vector<1x32x256xf32>
    %40 = arith.addf %38, %39 : vector<1x32x256xf32>
    %cst_22 = arith.constant 5.000000e-01 : f32
    %41 = vector.broadcast %cst_22 : f32 to vector<1x32x256xf32>
    %42 = arith.mulf %41, %40 : vector<1x32x256xf32>
    %cst_23 = arith.constant 0.707106769 : f32
    %43 = vector.broadcast %cst_23 : f32 to vector<1x32x256xf32>
    %44 = arith.mulf %40, %43 : vector<1x32x256xf32>
    %45 = math.erf %44 : vector<1x32x256xf32>
    %cst_24 = arith.constant 1.000000e+00 : f32
    %46 = vector.broadcast %cst_24 : f32 to vector<1x32x256xf32>
    %47 = arith.addf %46, %45 : vector<1x32x256xf32>
    %48 = arith.mulf %42, %47 : vector<1x32x256xf32>
    %49 = vector.shape_cast %2 : vector<32x32xf32> to vector<1x32x32xf32>
    "tpu.trace_start"() <{level = 10 : i32, message = "bom,bml->bol"}> : () -> ()
    %cst_25 = arith.constant dense<0.000000e+00> : vector<1x32x256xf32>
    %50 = tpu.matmul %49, %48, %cst_25 {dimension_numbers = #tpu.dot_dimension_numbers<[2], [1], [1], [2], [0, 0, 0, 1, 1, 2], [0], [0]>} : vector<1x32x32xf32>, vector<1x32x256xf32>, vector<1x32x256xf32> -> vector<1x32x256xf32>
    "tpu.trace_stop"() : () -> ()
    %51 = vector.shape_cast %6 : vector<32x1xf32> to vector<1x32x1xf32>
    %52 = vector.broadcast %51 : vector<1x32x1xf32> to vector<1x32x256xf32>
    %53 = arith.addf %50, %52 : vector<1x32x256xf32>
    %cst_26 = arith.constant dense<0.000000e+00> : vector<1xf32>
    %54 = vector.multi_reduction <add>, %53, %cst_26 [1, 2] : vector<1x32x256xf32> to vector<1xf32>
    %55 = vector.shape_cast %54 : vector<1xf32> to vector<1x1x1xf32>
    %56 = arith.mulf %53, %53 : vector<1x32x256xf32>
    %cst_27 = arith.constant dense<0.000000e+00> : vector<1xf32>
    %57 = vector.multi_reduction <add>, %56, %cst_27 [1, 2] : vector<1x32x256xf32> to vector<1xf32>
    %58 = vector.shape_cast %57 : vector<1xf32> to vector<1x1x1xf32>
    %cst_28 = arith.constant 8.192000e+03 : f32
    %59 = vector.broadcast %cst_28 : f32 to vector<1x1x1xf32>
    %60 = arith.divf %55, %59 : vector<1x1x1xf32>
    %cst_29 = arith.constant 8.192000e+03 : f32
    %61 = vector.broadcast %cst_29 : f32 to vector<1x1x1xf32>
    %62 = arith.divf %58, %61 : vector<1x1x1xf32>
    %63 = arith.mulf %60, %60 : vector<1x1x1xf32>
    %64 = arith.subf %62, %63 : vector<1x1x1xf32>
    %cst_30 = arith.constant 0.000000e+00 : f32
    %65 = vector.broadcast %cst_30 : f32 to vector<1x1x1xf32>
    %66 = arith.maximumf %64, %65 : vector<1x1x1xf32>
    %cst_31 = arith.constant 9.99999974E-6 : f32
    %67 = vector.broadcast %cst_31 : f32 to vector<1x1x1xf32>
    %68 = arith.addf %66, %67 : vector<1x1x1xf32>
    %69 = math.rsqrt %68 : vector<1x1x1xf32>
    %70 = vector.shape_cast %7 : vector<32x1xf32> to vector<1x32x1xf32>
    %71 = vector.broadcast %69 : vector<1x1x1xf32> to vector<1x32x1xf32>
    %72 = arith.mulf %71, %70 : vector<1x32x1xf32>
    %73 = vector.shape_cast %8 : vector<32x1xf32> to vector<1x32x1xf32>
    %74 = vector.broadcast %60 : vector<1x1x1xf32> to vector<1x32x1xf32>
    %75 = arith.mulf %74, %72 : vector<1x32x1xf32>
    %76 = arith.subf %73, %75 : vector<1x32x1xf32>
    %77 = vector.broadcast %72 : vector<1x32x1xf32> to vector<1x32x256xf32>
    %78 = arith.mulf %53, %77 : vector<1x32x256xf32>
    %79 = vector.broadcast %76 : vector<1x32x1xf32> to vector<1x32x256xf32>
    %80 = arith.addf %78, %79 : vector<1x32x256xf32>
    %c0_32 = arith.constant 0 : index
    %c0_33 = arith.constant 0 : index
    %c0_34 = arith.constant 0 : index
    %81 = vector.load %arg6[%c0_32, %c0_33, %c0_34] : memref<1x32x256xf32, #tpu.memory_space<vmem>>, vector<1x32x256xf32>
    tpu.vector_store %arg6[%c0_32, %c0_33, %c0_34], %80 {strides = array<i32>} : memref<1x32x256xf32, #tpu.memory_space<vmem>>, vector<1x32x256xf32>,
    return
  }
  func.func @transform_0(%arg0: i32) -> (i32, i32, i32) {
    %c0_i32 = arith.constant 0 : i32
    %c0_i32_0 = arith.constant 0 : i32
    %c0_i32_1 = arith.constant 0 : i32
    return %arg0, %c0_i32, %c0_i32_0 : i32, i32, i32
  }
  func.func @transform_1(%arg0: i32) -> (i32, i32) {
    %c0_i32 = arith.constant 0 : i32
    %c0_i32_0 = arith.constant 0 : i32
    %c0_i32_1 = arith.constant 0 : i32
    return %c0_i32, %c0_i32_0 : i32, i32
  }
  func.func @transform_2(%arg0: i32) -> (i32, i32) {
    %c0_i32 = arith.constant 0 : i32
    %c0_i32_0 = arith.constant 0 : i32
    %c0_i32_1 = arith.constant 0 : i32
    return %c0_i32, %c0_i32_0 : i32, i32
  }
  func.func @transform_3(%arg0: i32) -> (i32, i32) {
    %c0_i32 = arith.constant 0 : i32
    %c0_i32_0 = arith.constant 0 : i32
    %c0_i32_1 = arith.constant 0 : i32
    return %c0_i32, %c0_i32_0 : i32, i32
  }
  func.func @transform_4(%arg0: i32) -> (i32, i32) {
    %c0_i32 = arith.constant 0 : i32
    %c0_i32_0 = arith.constant 0 : i32
    %c0_i32_1 = arith.constant 0 : i32
    return %c0_i32, %c0_i32_0 : i32, i32
  }
  func.func @transform_5(%arg0: i32) -> (i32, i32, i32) {
    %c0_i32 = arith.constant 0 : i32
    %c0_i32_0 = arith.constant 0 : i32
    %c0_i32_1 = arith.constant 0 : i32
    return %arg0, %c0_i32, %c0_i32_0 : i32, i32, i32
  }
}

</mosaic_0001>

<llo_original>
// kernel: head_block_pallas.1
$region0: #{head_block_pallas.1}
  #allocation0 [shape = 'u32[]', space=smem, size = 0x4, offset = 0x4, fixed_abs, tag = 'smem constant byte address 0x4 - core index']
  #allocation1 [shape = 'u32[144,128]{1,0:T(1,128)}', space=vmem, size = 0x12000, scoped, tag = 'internal scratch']
  %s0 = inlined_call_operand.vmem [shape: f32[2,4,256], index: 0, kind: input, shape index: {}]
  %s1 = inlined_call_operand.vmem [shape: f32[32,4], index: 1, kind: input, shape index: {}]
  %s2 = inlined_call_operand.vmem [shape: f32[32,3], index: 2, kind: input, shape index: {}]
  %s3 = inlined_call_operand.vmem [shape: f32[32,32], index: 3, kind: input, shape index: {}]
  %s4 = inlined_call_operand.vmem [shape: f32[32,3], index: 4, kind: input, shape index: {}]
  %s5 = inlined_call_operand.vmem [shape: f32[2,32,256], index: 5, kind: output, shape index: {}]
  %s6 = sld [smem:[#allocation0]]
  $region53: #{head_block_pallas.1} parent=0
    _
  %s8 = ssub.s32 1, %s6
  %s9 = scalar_select 0, %s8, %s6
  loop: start=0, step=1, limit=4
  $region2: #{head_block_pallas.1} parent=0 // loop_pre_header
    _
  $region3: #{head_block_pallas.1} parent=0 // loop_header
    %s11 = sphi 0, %s15
    %p12 = scmp.ge.s32.totalorder %s11, 4
    %s21 = sphi 0, %s23
    %s24 = sphi 0, %s21
    %s25 = sphi 0, %s24
    %s41 = sphi 0, %s25
    %s45 = sphi 0, %s45
    %s47 = sphi 0, %s45
    %s48 = sphi 0, %s47
    %s62 = sphi 0, %s48
    %s66 = sphi 0, %s66
    %s68 = sphi 0, %s66
    %s69 = sphi 0, %s68
    %s83 = sphi 0, %s69
    %s87 = sphi 0, %s87
    %s89 = sphi 0, %s87
    %s90 = sphi 0, %s89
    %s104 = sphi 0, %s90
    %s108 = sphi 0, %s108
    %s110 = sphi 0, %s108
    %s111 = sphi 0, %s110
    %s125 = sphi 0, %s111
    %s131 = sphi 0, %s133
    %s134 = sphi 0, %s131
    %s135 = sphi 0, %s134
    %s151 = sphi 0, %s135
  $region4: #{head_block_pallas.1} parent=0 // loop_header_branch
    %14 = sbr.rel (%p12) target = $region8
  $region5: #{head_block_pallas.1} parent=0 // loop_body
    %s16 = ssub.s32 %s11, 1
    %s17 = ssub.s32 %s11, 2
    %s18 = sadd.s32 %s11, 1
    %s19 = ssub.s32 %s11, %s18
    %p20 = scmp.eq.s32.totalorder %s19, 0
    %s22 = sadd.s32 %s21, 1
    %s23 = scalar_select %p20, %s21, %s22
    %p26 = pneg %p20
    %p27 = scmp.eq.s32.totalorder %s11, 1
    %p28 = por %p26, %p27
    %p29 = scmp.ne.s32.totalorder %s21, %s24
    %p30 = scmp.eq.s32.totalorder %s11, 0
    %p31 = por %p29, %p30
    %p32 = scmp.ne.s32.totalorder %s21, %s24
    %p33 = scmp.eq.s32.totalorder %s16, 1
    %p34 = por %p32, %p33
    %p35 = scmp.ne.s32.totalorder %s24, %s25
    %p36 = scmp.eq.s32.totalorder %s16, 0
    %p37 = por %p35, %p36
    %p38 = scmp.ne.s32.totalorder %s24, %s25
    %p39 = scmp.eq.s32.totalorder %s17, 1
    %p40 = por %p38, %p39
    %p42 = scmp.ne.s32.totalorder %s25, %s41
    %p43 = scmp.eq.s32.totalorder %s17, 0
    %p44 = por %p42, %p43
    %s46 = sadd.s32 %s45, 1
    %p49 = scmp.eq.s32.totalorder %s11, 1
    %p50 = scmp.ne.s32.totalorder %s45, %s47
    %p51 = scmp.eq.s32.totalorder %s11, 0
    %p52 = por %p50, %p51
    %p53 = scmp.ne.s32.totalorder %s45, %s47
    %p54 = scmp.eq.s32.totalorder %s16, 1
    %p55 = por %p53, %p54
    %p56 = scmp.ne.s32.totalorder %s47, %s48
    %p57 = scmp.eq.s32.totalorder %s16, 0
    %p58 = por %p56, %p57
    %p59 = scmp.ne.s32.totalorder %s47, %s48
    %p60 = scmp.eq.s32.totalorder %s17, 1
    %p61 = por %p59, %p60
    %p63 = scmp.ne.s32.totalorder %s48, %s62
    %p64 = scmp.eq.s32.totalorder %s17, 0
    %p65 = por %p63, %p64
    %s67 = sadd.s32 %s66, 1
    %p70 = scmp.eq.s32.totalorder %s11, 1
    %p71 = scmp.ne.s32.totalorder %s66, %s68
    %p72 = scmp.eq.s32.totalorder %s11, 0
    %p73 = por %p71, %p72
    %p74 = scmp.ne.s32.totalorder %s66, %s68
    %p75 = scmp.eq.s32.totalorder %s16, 1
    %p76 = por %p74, %p75
    %p77 = scmp.ne.s32.totalorder %s68, %s69
    %p78 = scmp.eq.s32.totalorder %s16, 0
    %p79 = por %p77, %p78
    %p80 = scmp.ne.s32.totalorder %s68, %s69
    %p81 = scmp.eq.s32.totalorder %s17, 1
    %p82 = por %p80, %p81
    %p84 = scmp.ne.s32.totalorder %s69, %s83
    %p85 = scmp.eq.s32.totalorder %s17, 0
    %p86 = por %p84, %p85
    %s88 = sadd.s32 %s87, 1
    %p91 = scmp.eq.s32.totalorder %s11, 1
    %p92 = scmp.ne.s32.totalorder %s87, %s89
    %p93 = scmp.eq.s32.totalorder %s11, 0
    %p94 = por %p92, %p93
    %p95 = scmp.ne.s32.totalorder %s87, %s89
    %p96 = scmp.eq.s32.totalorder %s16, 1
    %p97 = por %p95, %p96
    %p98 = scmp.ne.s32.totalorder %s89, %s90
    %p99 = scmp.eq.s32.totalorder %s16, 0
    %p100 = por %p98, %p99
    %p101 = scmp.ne.s32.totalorder %s89, %s90
    %p102 = scmp.eq.s32.totalorder %s17, 1
    %p103 = por %p101, %p102
    %p105 = scmp.ne.s32.totalorder %s90, %s104
    %p106 = scmp.eq.s32.totalorder %s17, 0
    %p107 = por %p105, %p106
    %s109 = sadd.s32 %s108, 1
    %p112 = scmp.eq.s32.totalorder %s11, 1
    %p113 = scmp.ne.s32.totalorder %s108, %s110
    %p114 = scmp.eq.s32.totalorder %s11, 0
    %p115 = por %p113, %p114
    %p116 = scmp.ne.s32.totalorder %s108, %s110
    %p117 = scmp.eq.s32.totalorder %s16, 1
    %p118 = por %p116, %p117
    %p119 = scmp.ne.s32.totalorder %s110, %s111
    %p120 = scmp.eq.s32.totalorder %s16, 0
    %p121 = por %p119, %p120
    %p122 = scmp.ne.s32.totalorder %s110, %s111
    %p123 = scmp.eq.s32.totalorder %s17, 1
    %p124 = por %p122, %p123
    %p126 = scmp.ne.s32.totalorder %s111, %s125
    %p127 = scmp.eq.s32.totalorder %s17, 0
    %p128 = por %p126, %p127
    %s129 = ssub.s32 %s11, %s18
    %p130 = scmp.eq.s32.totalorder %s129, 0
    %s132 = sadd.s32 %s131, 1
    %s133 = scalar_select %p130, %s131, %s132
    %p136 = pneg %p130
    %p137 = scmp.eq.s32.totalorder %s11, 1
    %p138 = por %p136, %p137
    %p139 = scmp.ne.s32.totalorder %s131, %s134
    %p140 = scmp.eq.s32.totalorder %s11, 0
    %p141 = por %p139, %p140
    %p142 = scmp.ne.s32.totalorder %s131, %s134
    %p143 = scmp.eq.s32.totalorder %s16, 1
    %p144 = por %p142, %p143
    %p145 = scmp.ne.s32.totalorder %s134, %s135
    %p146 = scmp.eq.s32.totalorder %s16, 0
    %p147 = por %p145, %p146
    %p148 = scmp.ne.s32.totalorder %s134, %s135
    %p149 = scmp.eq.s32.totalorder %s17, 1
    %p150 = por %p148, %p149
    %p152 = scmp.ne.s32.totalorder %s135, %s151
    %p153 = scmp.eq.s32.totalorder %s17, 0
    %p154 = por %p152, %p153
    %p155 = scmp.le.s32.totalorder 1, %s11
    %p156 = scmp.lt.s32.totalorder %s11, 3
    %p157 = pnand %p155, %p156
    %p158 = pneg %p157
    // Predicated region
    $region9: #{head_block_pallas.1} parent=5 // pred_check
      _
    $region10: #{head_block_pallas.1} parent=5 // pred_check_branch
      %160 = sbr.rel (%p157) target = $region12
    $region11: #{head_block_pallas.1} parent=5 // pred_region
      %s161 = ssub.s32 %s11, 1
      // Predicated region
      $region13: #{head_block_pallas.1} parent=11 // pred_check
        %p162 = pneg %p58
      $region14: #{head_block_pallas.1} parent=11 // pred_check_branch
        %164 = sbr.rel (%p162) target = $region16
      $region15: #{head_block_pallas.1} parent=11 // pred_region
        _
      $region16: #{head_block_pallas.1} parent=11 // pred_fallthru
        _
      // Predicated region
      $region17: #{head_block_pallas.1} parent=11 // pred_check
        %p165 = pneg %p79
      $region18: #{head_block_pallas.1} parent=11 // pred_check_branch
        %167 = sbr.rel (%p165) target = $region20
      $region19: #{head_block_pallas.1} parent=11 // pred_region
        _
      $region20: #{head_block_pallas.1} parent=11 // pred_fallthru
        _
      // Predicated region
      $region21: #{head_block_pallas.1} parent=11 // pred_check
        %p168 = pneg %p100
      $region22: #{head_block_pallas.1} parent=11 // pred_check_branch
        %170 = sbr.rel (%p168) target = $region24
      $region23: #{head_block_pallas.1} parent=11 // pred_region
        _
      $region24: #{head_block_pallas.1} parent=11 // pred_fallthru
        _
      // Predicated region
      $region25: #{head_block_pallas.1} parent=11 // pred_check
        %p171 = pneg %p121
      $region26: #{head_block_pallas.1} parent=11 // pred_check_branch
        %173 = sbr.rel (%p171) target = $region28
      $region27: #{head_block_pallas.1} parent=11 // pred_region
        _
      $region28: #{head_block_pallas.1} parent=11 // pred_fallthru
        _
    $region12: #{head_block_pallas.1} parent=5 // pred_fallthru
      _
    %p174 = scmp.lt.s32.totalorder %s11, 2
    // Predicated region
    $region29: #{head_block_pallas.1} parent=5 // pred_check
      %p175 = pneg %p174
    $region30: #{head_block_pallas.1} parent=5 // pred_check_branch
      %177 = sbr.rel (%p175) target = $region32
    $region31: #{head_block_pallas.1} parent=5 // pred_region
      // Predicated region
      $region33: #{head_block_pallas.1} parent=31 // pred_check
        %p178 = pneg %p31
      $region34: #{head_block_pallas.1} parent=31 // pred_check_branch
        %180 = sbr.rel (%p178) target = $region36
      $region35: #{head_block_pallas.1} parent=31 // pred_region
        %p181 = scmp.lt.s32.totalorder %s11, 1
        %s182 = scalar_select %p181, %s11, 1
        %s183 = smul.addr %s182, 2
        %s184 = smul.addr %s183, 4
        %s185 = scalar_lea.vmem %s0, %s184
      $region36: #{head_block_pallas.1} parent=31 // pred_fallthru
        _
    $region32: #{head_block_pallas.1} parent=5 // pred_fallthru
      _
    %p186 = scmp.le.s32.totalorder 1, %s11
    %p187 = scmp.lt.s32.totalorder %s11, 3
    %p188 = pnand %p186, %p187
    %p189 = pneg %p188
    // Predicated region
    $region37: #{head_block_pallas.1} parent=5 // pred_check
      _
    $region38: #{head_block_pallas.1} parent=5 // pred_check_branch
      %191 = sbr.rel (%p188) target = $region40
    $region39: #{head_block_pallas.1} parent=5 // pred_region
      %s192 = ssub.s32 %s11, 1
      %p193 = scmp.lt.s32.totalorder %s16, 1
      %s194 = scalar_select %p193, %s16, 1
      %s195 = smul.addr %s194, 2
      %s196 = smul.addr %s195, 4
      %s197 = scalar_lea.vmem %s0, %s196
      %p198 = pneg %p37
      %p199 = pneg %p34
      %p200 = pneg %p58
      %p201 = pneg %p55
      %p202 = pneg %p79
      %p203 = pneg %p76
      %p204 = pneg %p100
      %p205 = pneg %p97
      %p206 = pneg %p121
      %p207 = pneg %p118
      %p208 = pneg %p147
      %p209 = pneg %p144
      %p210 = scmp.lt.s32.totalorder %s16, 1
      %s211 = scalar_select %p210, %s16, 1
      %s212 = smul.addr %s211, 8
      %s213 = smul.addr %s212, 8
      %s214 = scalar_lea.vmem %s5, %s213
      %p215 = scmp.lt.s32.totalorder %s16, 1
      %s216 = scalar_select %p215, %s16, 1
      %s217 = smul.addr %s216, 2
      %s218 = smul.addr %s217, 4
      %s219 = scalar_lea.vmem %s0, %s218
      %p220 = scmp.lt.s32.totalorder %s16, 1
      %s221 = scalar_select %p220, %s16, 1
      %s222 = smul.addr %s221, 8
      %s223 = smul.addr %s222, 8
      %s224 = scalar_lea.vmem %s5, %s223
      %v225 = vld [vmem:[%s219] sm:$0xff]
      %v226 = vld [vmem:[%s1] sm:$0xff]
      %v227 = vld [vmem:[%s1 + $0x8] sm:$0xff]
      %v228 = vld [vmem:[%s1 + $0x10] sm:$0xff]
      %v229 = vld [vmem:[%s1 + $0x18] sm:$0xff]
      %v230 = vld [vmem:[%s3] sm:$0xff]
      %v231 = vld [vmem:[%s3 + $0x8] sm:$0xff]
      %v232 = vld [vmem:[%s3 + $0x10] sm:$0xff]
      %v233 = vld [vmem:[%s3 + $0x18] sm:$0xff]
      %v234 = vld [vmem:[%s2] sm:$0xff]
      %v235 = vld [vmem:[%s2 + $0x8] sm:$0xff]
      %v236 = vld [vmem:[%s2 + $0x10] sm:$0xff]
      %v237 = vld [vmem:[%s2 + $0x18] sm:$0xff]
      %v238 = vld [vmem:[%s4] sm:$0xff]
      %v239 = vld [vmem:[%s4 + $0x8] sm:$0xff]
      %v240 = vld [vmem:[%s4 + $0x10] sm:$0xff]
      %v241 = vld [vmem:[%s4 + $0x18] sm:$0xff]
      %243 = vset.pattern.permute.xlu0 0
      %244 = vperm.xlu0 %243, %v234
      %v245 = vpop.permute.xlu0 %244
      %248 = vset.pattern.permute.xlu0 0
      %249 = vperm.xlu0 %248, %v235
      %v250 = vpop.permute.xlu0 %249
      %253 = vset.pattern.permute.xlu0 0
      %254 = vperm.xlu0 %253, %v236
      %v255 = vpop.permute.xlu0 %254
      %258 = vset.pattern.permute.xlu0 0
      %259 = vperm.xlu0 %258, %v237
      %v260 = vpop.permute.xlu0 %259
      %v263 = vcombine.high %v225, %v225
      %vm264 = vcmask 31744
      %v266 = vsel %vm264, %v226, 0
      %v269 = vsel %vm264, %v227, 0
      %v272 = vsel %vm264, %v228, 0
      %v275 = vsel %vm264, %v229, 0
      %vm277 = vcmask 1043456
      %v278 = vsel %vm277, %v225, 0
      %v280 = vsel %vm277, %v263, 0
      %282 = vmatprep.subr.mxu0 0.0
      %283 = vmatpush1.msra.mxu0 0.0
      %284 = vmatprep.subr.mxu0 0.0
      %285 = vmatpush1.msra.mxu0 0.0
      %286 = vmatprep.subr.mxu0 0.0
      %287 = vmatpush1.msra.mxu0 0.0
      %288 = vmatprep.subr.mxu0 0.0
      %289 = vmatpush1.msra.mxu0 0.0
      %290 = vmatprep.subr.mxu0 0.0
      %291 = vmatpush1.msra.mxu0 0.0
      %292 = vmatprep.subr.mxu0 0.0
      %293 = vmatpush1.msra.mxu0 0.0
      %294 = vmatprep.subr.mxu0 0.0
      %295 = vmatpush1.msra.mxu0 0.0
      %296 = vmatprep.subr.mxu0 0.0
      %297 = vmatpush1.msra.mxu0 0.0
      %298 = vmatprep.subr.mxu0 0.0
      %299 = vmatpush1.msra.mxu0 0.0
      %300 = vmatprep.subr.mxu0 0.0
      %301 = vmatpush1.msra.mxu0 0.0
      %302 = vmatprep.subr.mxu0 0.0
      %303 = vmatpush1.msra.mxu0 0.0
      %304 = vmatprep.subr.mxu0 0.0
      %305 = vmatpush1.msra.mxu0 0.0
      %306 = vmatprep.subr.mxu0 0.0
      %307 = vmatpush1.msra.mxu0 0.0
      %308 = vmatprep.subr.mxu0 0.0
      %309 = vmatpush1.msra.mxu0 0.0
      %310 = vmatprep.subr.mxu0 0.0
      %311 = vmatpush1.msra.mxu0 0.0
      %312 = vmatprep.subr.mxu0 %v280
      %313 = vmatpush1.msra.mxu0 %v278
      %314 = vmatprep.subr.mxu0 0.0
      %315 = vmatpush2.msra.mxu0 0.0
      %316 = vmatprep.subr.mxu0 0.0
      %317 = vmatpush2.msra.mxu0 0.0
      %318 = vmatprep.subr.mxu0 0.0
      %319 = vmatpush2.msra.mxu0 0.0
      %320 = vmatprep.subr.mxu0 0.0
      %321 = vmatpush2.msra.mxu0 0.0
      %322 = vmatprep.subr.mxu0 0.0
      %323 = vmatpush2.msra.mxu0 0.0
      %324 = vmatprep.subr.mxu0 0.0
      %325 = vmatpush2.msra.mxu0 0.0
      %326 = vmatprep.subr.mxu0 0.0
      %327 = vmatpush2.msra.mxu0 0.0
      %328 = vmatprep.subr.mxu0 0.0
      %329 = vmatpush2.msra.mxu0 0.0
      %330 = vmatprep.subr.mxu0 0.0
      %331 = vmatpush2.msra.mxu0 0.0
      %332 = vmatprep.subr.mxu0 0.0
      %333 = vmatpush2.msra.mxu0 0.0
      %334 = vmatprep.subr.mxu0 0.0
      %335 = vmatpush2.msra.mxu0 0.0
      %336 = vmatprep.subr.mxu0 0.0
      %337 = vmatpush2.msra.mxu0 0.0
      %338 = vmatprep.subr.mxu0 0.0
      %339 = vmatpush2.msra.mxu0 0.0
      %340 = vmatprep.subr.mxu0 0.0
      %341 = vmatpush2.msra.mxu0 0.0
      %342 = vmatprep.subr.mxu0 0.0
      %343 = vmatpush2.msra.mxu0 0.0
      %344 = vmatprep.subr.mxu0 0.0
      %345 = vmatpush2.msra.mxu0 0.0
      %346 = vmatprep.mubr.f32.mxu0 0.0
      %347 = vmatmul.mubr.f32.gmra.mxu0 %v266
      %v348 = vpop.f32.mrf.mxu0
      %v349 = vadd.f32 %v245, %v348
      %v350 = vpop.f32.mrf.mxu0
      %v351 = vadd.f32 %v245, %v350
      %352 = vmatprep.mubr.f32.mxu0 0.0
      %353 = vmatmul.mubr.f32.gmra.mxu0 %v269
      %v354 = vpop.f32.mrf.mxu0
      %v355 = vadd.f32 %v250, %v354
      %v356 = vpop.f32.mrf.mxu0
      %v357 = vadd.f32 %v250, %v356
      %358 = vmatprep.mubr.f32.mxu0 0.0
      %359 = vmatmul.mubr.f32.gmra.mxu0 %v272
      %v360 = vpop.f32.mrf.mxu0
      %v361 = vadd.f32 %v255, %v360
      %v362 = vpop.f32.mrf.mxu0
      %v363 = vadd.f32 %v255, %v362
      %364 = vmatprep.mubr.f32.mxu0 0.0
      %365 = vmatmul.mubr.f32.gmra.mxu0 %v275
      %v366 = vpop.f32.mrf.mxu0
      %v367 = vadd.f32 %v260, %v366
      %v368 = vpop.f32.mrf.mxu0
      %v369 = vadd.f32 %v260, %v368
      %370 = vdwg.mxu0
      %v371 = vadd.f32 %v349, %v351
      %v372 = vadd.f32 %v371, %v355
      %v373 = vadd.f32 %v372, %v357
      %v374 = vadd.f32 %v373, %v361
      %v375 = vadd.f32 %v374, %v363
      %v376 = vadd.f32 %v375, %v367
      %v377 = vadd.f32 %v376, %v369
      %378 = vadd.xlane.f32.xlu0 %v377
      %v379 = vpop.xlane.xlu0 %378
      %v380 = vrot.slane %v379, 4
      %v381 = vadd.f32 %v379, %v380
      %v382 = vrot.slane %v381, 2
      %v383 = vadd.f32 %v381, %v382
      %v384 = vrot.slane %v383, 1
      %v385 = vadd.f32 %v383, %v384
      %v386 = vmul.f32 %v349, %v349
      %v387 = vmul.f32 %v351, %v351
      %v388 = vmul.f32 %v355, %v355
      %v389 = vmul.f32 %v357, %v357
      %v390 = vmul.f32 %v361, %v361
      %v391 = vmul.f32 %v363, %v363
      %v392 = vmul.f32 %v367, %v367
      %v393 = vmul.f32 %v369, %v369
      %v394 = vadd.f32 %v386, %v387
      %v395 = vadd.f32 %v394, %v388
      %v396 = vadd.f32 %v395, %v389
      %v397 = vadd.f32 %v396, %v390
      %v398 = vadd.f32 %v397, %v391
      %v399 = vadd.f32 %v398, %v392
      %v400 = vadd.f32 %v399, %v393
      %401 = vadd.xlane.f32.xlu0 %v400
      %v402 = vpop.xlane.xlu0 %401
      %v403 = vrot.slane %v402, 4
      %v404 = vadd.f32 %v402, %v403
      %v405 = vrot.slane %v404, 2
      %v406 = vadd.f32 %v404, %v405
      %v407 = vrot.slane %v406, 1
      %v408 = vadd.f32 %v406, %v407
      %v409 = vrcp.pop 8192.0
      %v410 = vmul.f32 %v385, %v409
      %v411 = vmul.f32 %v408, %v409
      %v412 = vmul.f32 %v410, %v410
      %v413 = vsub.f32 %v411, %v412
      %v414 = vmax.f32 %v413, 0.0
      %v415 = vadd.f32 %v414, 1e-05
      %v416 = vrsqrt.pop %v415
      %v417 = vmul.f32 %v416, %v234
      %v418 = vmul.f32 %v416, %v235
      %v419 = vmul.f32 %v416, %v236
      %v420 = vmul.f32 %v416, %v237
      %v421 = vmul.f32 %v410, %v417
      %v422 = vmul.f32 %v410, %v418
      %v423 = vmul.f32 %v410, %v419
      %v424 = vmul.f32 %v410, %v420
      %429 = vrot.lane.b32.xlu0 %v421, 1
      %v430 = vpop.permute.xlu0 %429
      %431 = vrot.lane.b32.xlu0 %v422, 1
      %v432 = vpop.permute.xlu0 %431
      %433 = vrot.lane.b32.xlu0 %v423, 1
      %v434 = vpop.permute.xlu0 %433
      %435 = vrot.lane.b32.xlu0 %v424, 1
      %v436 = vpop.permute.xlu0 %435
      %v441 = vsub.f32 %v234, %v430
      %v442 = vsub.f32 %v235, %v432
      %v443 = vsub.f32 %v236, %v434
      %v444 = vsub.f32 %v237, %v436
      %446 = vset.pattern.permute.xlu0 1
      %447 = vperm.xlu0 %446, %v417
      %v448 = vpop.permute.xlu0 %447
      %451 = vset.pattern.permute.xlu0 1
      %452 = vperm.xlu0 %451, %v418
      %v453 = vpop.permute.xlu0 %452
      %456 = vset.pattern.permute.xlu0 1
      %457 = vperm.xlu0 %456, %v419
      %v458 = vpop.permute.xlu0 %457
      %461 = vset.pattern.permute.xlu0 1
      %462 = vperm.xlu0 %461, %v420
      %v463 = vpop.permute.xlu0 %462
      %v465 = vmul.f32 %v349, %v448
      %v466 = vmul.f32 %v351, %v448
      %v467 = vmul.f32 %v355, %v453
      %v468 = vmul.f32 %v357, %v453
      %v469 = vmul.f32 %v361, %v458
      %v470 = vmul.f32 %v363, %v458
      %v471 = vmul.f32 %v367, %v463
      %v472 = vmul.f32 %v369, %v463
      %474 = vset.pattern.permute.xlu0 2
      %475 = vperm.xlu0 %474, %v441
      %v476 = vpop.permute.xlu0 %475
      %479 = vset.pattern.permute.xlu0 2
      %480 = vperm.xlu0 %479, %v442
      %v481 = vpop.permute.xlu0 %480
      %484 = vset.pattern.permute.xlu0 2
      %485 = vperm.xlu0 %484, %v443
      %v486 = vpop.permute.xlu0 %485
      %489 = vset.pattern.permute.xlu0 2
      %490 = vperm.xlu0 %489, %v444
      %v491 = vpop.permute.xlu0 %490
      %v493 = vadd.f32 %v465, %v476
      %v494 = vadd.f32 %v466, %v476
      %v495 = vadd.f32 %v467, %v481
      %v496 = vadd.f32 %v468, %v481
      %v497 = vadd.f32 %v469, %v486
      %v498 = vadd.f32 %v470, %v486
      %v499 = vadd.f32 %v471, %v491
      %v500 = vadd.f32 %v472, %v491
      %v501 = vmul.f32 %v493, 0.5
      %v502 = vmul.f32 %v494, 0.5
      %v503 = vmul.f32 %v495, 0.5
      %v504 = vmul.f32 %v496, 0.5
      %v505 = vmul.f32 %v497, 0.5
      %v506 = vmul.f32 %v498, 0.5
      %v507 = vmul.f32 %v499, 0.5
      %v508 = vmul.f32 %v500, 0.5
      %v509 = vmul.f32 %v493, 0.70710677
      %v510 = vmul.f32 %v494, 0.70710677
      %v511 = vmul.f32 %v495, 0.70710677
      %v512 = vmul.f32 %v496, 0.70710677
      %v513 = vmul.f32 %v497, 0.70710677
      %v514 = vmul.f32 %v498, 0.70710677
      %v515 = vmul.f32 %v499, 0.70710677
      %v516 = vmul.f32 %v500, 0.70710677
      %v517 = verf.f32.pop %v509
      %v518 = verf.f32.pop %v510
      %v519 = verf.f32.pop %v511
      %v520 = verf.f32.pop %v512
      %v521 = verf.f32.pop %v513
      %v522 = verf.f32.pop %v514
      %v523 = verf.f32.pop %v515
      %v524 = verf.f32.pop %v516
      %v525 = vadd.f32 %v517, 1.0
      %v526 = vadd.f32 %v518, 1.0
      %v527 = vadd.f32 %v519, 1.0
      %v528 = vadd.f32 %v520, 1.0
      %v529 = vadd.f32 %v521, 1.0
      %v530 = vadd.f32 %v522, 1.0
      %v531 = vadd.f32 %v523, 1.0
      %v532 = vadd.f32 %v524, 1.0
      %v533 = vmul.f32 %v501, %v525
      %v534 = vmul.f32 %v502, %v526
      %v535 = vmul.f32 %v503, %v527
      %v536 = vmul.f32 %v504, %v528
      %v537 = vmul.f32 %v505, %v529
      %v538 = vmul.f32 %v506, %v530
      %v539 = vmul.f32 %v507, %v531
      %v540 = vmul.f32 %v508, %v532
      %542 = vset.pattern.permute.xlu0 0
      %543 = vperm.xlu0 %542, %v238
      %v544 = vpop.permute.xlu0 %543
      %547 = vset.pattern.permute.xlu0 0
      %548 = vperm.xlu0 %547, %v239
      %v549 = vpop.permute.xlu0 %548
      %552 = vset.pattern.permute.xlu0 0
      %553 = vperm.xlu0 %552, %v240
      %v554 = vpop.permute.xlu0 %553
      %557 = vset.pattern.permute.xlu0 0
      %558 = vperm.xlu0 %557, %v241
      %v559 = vpop.permute.xlu0 %558
      %vm561 = vcmask 261120
      %v563 = vsel %vm561, %v230, 0
      %v566 = vsel %vm561, %v231, 0
      %v569 = vsel %vm561, %v232, 0
      %v572 = vsel %vm561, %v233, 0
      %574 = vmatprep.subr.mxu0 0.0
      %575 = vmatpush1.msra.mxu0 0.0
      %576 = vmatprep.subr.mxu0 0.0
      %577 = vmatpush1.msra.mxu0 0.0
      %578 = vmatprep.subr.mxu0 0.0
      %579 = vmatpush1.msra.mxu0 0.0
      %580 = vmatprep.subr.mxu0 0.0
      %581 = vmatpush1.msra.mxu0 0.0
      %582 = vmatprep.subr.mxu0 0.0
      %583 = vmatpush1.msra.mxu0 0.0
      %584 = vmatprep.subr.mxu0 0.0
      %585 = vmatpush1.msra.mxu0 0.0
      %586 = vmatprep.subr.mxu0 0.0
      %587 = vmatpush1.msra.mxu0 0.0
      %588 = vmatprep.subr.mxu0 0.0
      %589 = vmatpush1.msra.mxu0 0.0
      %590 = vmatprep.subr.mxu0 0.0
      %591 = vmatpush1.msra.mxu0 0.0
      %592 = vmatprep.subr.mxu0 0.0
      %593 = vmatpush1.msra.mxu0 0.0
      %594 = vmatprep.subr.mxu0 0.0
      %595 = vmatpush1.msra.mxu0 0.0
      %596 = vmatprep.subr.mxu0 0.0
      %597 = vmatpush1.msra.mxu0 0.0
      %598 = vmatprep.subr.mxu0 %v540
      %599 = vmatpush1.msra.mxu0 %v539
      %600 = vmatprep.subr.mxu0 %v538
      %601 = vmatpush1.msra.mxu0 %v537
      %602 = vmatprep.subr.mxu0 %v536
      %603 = vmatpush1.msra.mxu0 %v535
      %604 = vmatprep.subr.mxu0 %v534
      %605 = vmatpush1.msra.mxu0 %v533
      %606 = vmatprep.subr.mxu0 0.0
      %607 = vmatpush2.msra.mxu0 0.0
      %608 = vmatprep.subr.mxu0 0.0
      %609 = vmatpush2.msra.mxu0 0.0
      %610 = vmatprep.subr.mxu0 0.0
      %611 = vmatpush2.msra.mxu0 0.0
      %612 = vmatprep.subr.mxu0 0.0
      %613 = vmatpush2.msra.mxu0 0.0
      %614 = vmatprep.subr.mxu0 0.0
      %615 = vmatpush2.msra.mxu0 0.0
      %616 = vmatprep.subr.mxu0 0.0
      %617 = vmatpush2.msra.mxu0 0.0
      %618 = vmatprep.subr.mxu0 0.0
      %619 = vmatpush2.msra.mxu0 0.0
      %620 = vmatprep.subr.mxu0 0.0
      %621 = vmatpush2.msra.mxu0 0.0
      %622 = vmatprep.subr.mxu0 0.0
      %623 = vmatpush2.msra.mxu0 0.0
      %624 = vmatprep.subr.mxu0 0.0
      %625 = vmatpush2.msra.mxu0 0.0
      %626 = vmatprep.subr.mxu0 0.0
      %627 = vmatpush2.msra.mxu0 0.0
      %628 = vmatprep.subr.mxu0 0.0
      %629 = vmatpush2.msra.mxu0 0.0
      %630 = vmatprep.subr.mxu0 0.0
      %631 = vmatpush2.msra.mxu0 0.0
      %632 = vmatprep.subr.mxu0 0.0
      %633 = vmatpush2.msra.mxu0 0.0
      %634 = vmatprep.subr.mxu0 0.0
      %635 = vmatpush2.msra.mxu0 0.0
      %636 = vmatprep.subr.mxu0 0.0
      %637 = vmatpush2.msra.mxu0 0.0
      %638 = vmatprep.mubr.f32.mxu0 0.0
      %639 = vmatmul.mubr.f32.gmra.mxu0 %v563
      %v640 = vpop.f32.mrf.mxu0
      %v641 = vadd.f32 %v544, %v640
      %v642 = vpop.f32.mrf.mxu0
      %v643 = vadd.f32 %v544, %v642
      %644 = vmatprep.mubr.f32.mxu0 0.0
      %645 = vmatmul.mubr.f32.gmra.mxu0 %v566
      %v646 = vpop.f32.mrf.mxu0
      %v647 = vadd.f32 %v549, %v646
      %v648 = vpop.f32.mrf.mxu0
      %v649 = vadd.f32 %v549, %v648
      %650 = vmatprep.mubr.f32.mxu0 0.0
      %651 = vmatmul.mubr.f32.gmra.mxu0 %v569
      %v652 = vpop.f32.mrf.mxu0
      %v653 = vadd.f32 %v554, %v652
      %v654 = vpop.f32.mrf.mxu0
      %v655 = vadd.f32 %v554, %v654
      %656 = vmatprep.mubr.f32.mxu0 0.0
      %657 = vmatmul.mubr.f32.gmra.mxu0 %v572
      %v658 = vpop.f32.mrf.mxu0
      %v659 = vadd.f32 %v559, %v658
      %v660 = vpop.f32.mrf.mxu0
      %v661 = vadd.f32 %v559, %v660
      %662 = vdwg.mxu0
      %v663 = vadd.f32 %v641, %v643
      %v664 = vadd.f32 %v663, %v647
      %v665 = vadd.f32 %v664, %v649
      %v666 = vadd.f32 %v665, %v653
      %v667 = vadd.f32 %v666, %v655
      %v668 = vadd.f32 %v667, %v659
      %v669 = vadd.f32 %v668, %v661
      %670 = vadd.xlane.f32.xlu0 %v669
      %v671 = vpop.xlane.xlu0 %670
      %v672 = vrot.slane %v671, 4
      %v673 = vadd.f32 %v671, %v672
      %v674 = vrot.slane %v673, 2
      %v675 = vadd.f32 %v673, %v674
      %v676 = vrot.slane %v675, 1
      %v677 = vadd.f32 %v675, %v676
      %v678 = vmul.f32 %v641, %v641
      %v679 = vmul.f32 %v643, %v643
      %v680 = vmul.f32 %v647, %v647
      %v681 = vmul.f32 %v649, %v649
      %v682 = vmul.f32 %v653, %v653
      %v683 = vmul.f32 %v655, %v655
      %v684 = vmul.f32 %v659, %v659
      %v685 = vmul.f32 %v661, %v661
      %v686 = vadd.f32 %v678, %v679
      %v687 = vadd.f32 %v686, %v680
      %v688 = vadd.f32 %v687, %v681
      %v689 = vadd.f32 %v688, %v682
      %v690 = vadd.f32 %v689, %v683
      %v691 = vadd.f32 %v690, %v684
      %v692 = vadd.f32 %v691, %v685
      %693 = vadd.xlane.f32.xlu0 %v692
      %v694 = vpop.xlane.xlu0 %693
      %v695 = vrot.slane %v694, 4
      %v696 = vadd.f32 %v694, %v695
      %v697 = vrot.slane %v696, 2
      %v698 = vadd.f32 %v696, %v697
      %v699 = vrot.slane %v698, 1
      %v700 = vadd.f32 %v698, %v699
      %v701 = vmul.f32 %v677, %v409
      %v702 = vmul.f32 %v700, %v409
      %v703 = vmul.f32 %v701, %v701
      %v704 = vsub.f32 %v702, %v703
      %v705 = vmax.f32 %v704, 0.0
      %v706 = vadd.f32 %v705, 1e-05
      %v707 = vrsqrt.pop %v706
      %v708 = vmul.f32 %v707, %v238
      %v709 = vmul.f32 %v707, %v239
      %v710 = vmul.f32 %v707, %v240
      %v711 = vmul.f32 %v707, %v241
      %v712 = vmul.f32 %v701, %v708
      %v713 = vmul.f32 %v701, %v709
      %v714 = vmul.f32 %v701, %v710
      %v715 = vmul.f32 %v701, %v711
      %720 = vrot.lane.b32.xlu0 %v712, 1
      %v721 = vpop.permute.xlu0 %720
      %722 = vrot.lane.b32.xlu0 %v713, 1
      %v723 = vpop.permute.xlu0 %722
      %724 = vrot.lane.b32.xlu0 %v714, 1
      %v725 = vpop.permute.xlu0 %724
      %726 = vrot.lane.b32.xlu0 %v715, 1
      %v727 = vpop.permute.xlu0 %726
      %v732 = vsub.f32 %v238, %v721
      %v733 = vsub.f32 %v239, %v723
      %v734 = vsub.f32 %v240, %v725
      %v735 = vsub.f32 %v241, %v727
      %737 = vset.pattern.permute.xlu0 1
      %738 = vperm.xlu0 %737, %v708
      %v739 = vpop.permute.xlu0 %738
      %742 = vset.pattern.permute.xlu0 1
      %743 = vperm.xlu0 %742, %v709
      %v744 = vpop.permute.xlu0 %743
      %747 = vset.pattern.permute.xlu0 1
      %748 = vperm.xlu0 %747, %v710
      %v749 = vpop.permute.xlu0 %748
      %752 = vset.pattern.permute.xlu0 1
      %753 = vperm.xlu0 %752, %v711
      %v754 = vpop.permute.xlu0 %753
      %v756 = vmul.f32 %v641, %v739
      %v757 = vmul.f32 %v643, %v739
      %v758 = vmul.f32 %v647, %v744
      %v759 = vmul.f32 %v649, %v744
      %v760 = vmul.f32 %v653, %v749
      %v761 = vmul.f32 %v655, %v749
      %v762 = vmul.f32 %v659, %v754
      %v763 = vmul.f32 %v661, %v754
      %765 = vset.pattern.permute.xlu0 2
      %766 = vperm.xlu0 %765, %v732
      %v767 = vpop.permute.xlu0 %766
      %770 = vset.pattern.permute.xlu0 2
      %771 = vperm.xlu0 %770, %v733
      %v772 = vpop.permute.xlu0 %771
      %775 = vset.pattern.permute.xlu0 2
      %776 = vperm.xlu0 %775, %v734
      %v777 = vpop.permute.xlu0 %776
      %780 = vset.pattern.permute.xlu0 2
      %781 = vperm.xlu0 %780, %v735
      %v782 = vpop.permute.xlu0 %781
      %v784 = vadd.f32 %v756, %v767
      %v785 = vadd.f32 %v757, %v767
      %v786 = vadd.f32 %v758, %v772
      %v787 = vadd.f32 %v759, %v772
      %v788 = vadd.f32 %v760, %v777
      %v789 = vadd.f32 %v761, %v777
      %v790 = vadd.f32 %v762, %v782
      %v791 = vadd.f32 %v763, %v782
      %792 = vst [vmem:[%s224] sm:$0xff] %v784
      %793 = vst [vmem:[%s224 + $0x8] sm:$0xff] %v785
      %794 = vst [vmem:[%s224 + $0x10] sm:$0xff] %v786
      %795 = vst [vmem:[%s224 + $0x18] sm:$0xff] %v787
      %796 = vst [vmem:[%s224 + $0x20] sm:$0xff] %v788
      %797 = vst [vmem:[%s224 + $0x28] sm:$0xff] %v789
      %798 = vst [vmem:[%s224 + $0x30] sm:$0xff] %v790
      %799 = vst [vmem:[%s224 + $0x38] sm:$0xff] %v791
      %p800 = scmp.lt.s32.totalorder %s16, 1
      %s801 = scalar_select %p800, %s16, 1
      %s802 = smul.addr %s801, 8
      %s803 = smul.addr %s802, 8
      %s804 = scalar_lea.vmem %s5, %s803
      // Predicated region
      $region41: #{head_block_pallas.1} parent=39 // pred_check
        %p805 = pneg %p144
      $region42: #{head_block_pallas.1} parent=39 // pred_check_branch
        %807 = sbr.rel (%p805) target = $region44
      $region43: #{head_block_pallas.1} parent=39 // pred_region
        _
      $region44: #{head_block_pallas.1} parent=39 // pred_fallthru
        _
    $region40: #{head_block_pallas.1} parent=5 // pred_fallthru
      _
    %p808 = scmp.le.s32.totalorder 2, %s11
    // Predicated region
    $region45: #{head_block_pallas.1} parent=5 // pred_check
      %p809 = pneg %p808
    $region46: #{head_block_pallas.1} parent=5 // pred_check_branch
      %811 = sbr.rel (%p809) target = $region48
    $region47: #{head_block_pallas.1} parent=5 // pred_region
      %s812 = ssub.s32 %s11, 2
      // Predicated region
      $region49: #{head_block_pallas.1} parent=47 // pred_check
        %p813 = pneg %p150
      $region50: #{head_block_pallas.1} parent=47 // pred_check_branch
        %815 = sbr.rel (%p813) target = $region52
      $region51: #{head_block_pallas.1} parent=47 // pred_region
        %p816 = scmp.lt.s32.totalorder %s17, 1
        %s817 = scalar_select %p816, %s17, 1
        %s818 = smul.addr %s817, 8
        %s819 = smul.addr %s818, 8
        %s820 = scalar_lea.vmem %s5, %s819
      $region52: #{head_block_pallas.1} parent=47 // pred_fallthru
        _
    $region48: #{head_block_pallas.1} parent=5 // pred_fallthru
      _
  $region6: #{head_block_pallas.1} parent=0 // loop_footer
    %s15 = sadd.s32 1, %s11
  $region7: #{head_block_pallas.1} parent=0 // loop_footer_branch
    %10 = sbr.rel target = $region3
  $region8: #{head_block_pallas.1} parent=0 // loop_exit
    _

</llo_original>
